<compile_context>
chip_gen: v7x
topology: tpu7x:2x2x1
jax: 0.10.0
libtpu: 0.0.40
codegen_flags: <defaults>
</compile_context>

<pallas_src>
import functools

import jax
import jax.numpy as jnp
from jax.experimental import pallas as pl
from jax.experimental.pallas import tpu as pltpu


# ----------------------------- Pallas kernel ------------------------------ #
def din_kernel(item_ref, user_ref, ctx_ref, hist_ref, hlen_ref,
               watt_ref, batt_ref,
               w1i_ref, w1u_ref, w1c_ref, w1h_ref, b1_ref,
               w2_ref, b2_ref,
               wo_ref, bo_ref,
               out_ref):
    TB, T, Dh = hist_ref.shape
    f32 = jnp.float32
    cdt = w2_ref.dtype                              # MXU compute dtype (bf16)

    item = item_ref[...]                            # (TB, Di)
    item_c = item.astype(cdt)

    # --- HistAttProd: project item emb into history space (MXU, f32 acc) ---
    item_proj = (jnp.dot(item_c, watt_ref[...], preferred_element_type=f32)
                 + batt_ref[...])                   # (TB, Dh) f32

    # Single upcast of the history tile (VPU path stays f32; v5e-friendly).
    hist = hist_ref[...].astype(f32)                # (TB, T, Dh) f32

    # Attention scores: VPU broadcast-multiply + lane reduction (no per-row
    # 1xDh MXU matmuls that would saturate the extended slot / MRF pops).
    scores = jnp.sum(hist * item_proj[:, None, :], axis=-1)        # (TB, T) f32

    # Length mask + softmax over the history axis.  Rows with hist_len == 0
    # (e.g. padding rows) get an all-zero attention -> zero pooled vector.
    t_idx = jax.lax.broadcasted_iota(jnp.int32, (TB, T), 1)
    mask = t_idx < hlen_ref[...]                                   # (TB,1)->(TB,T)
    masked = jnp.where(mask, scores, -1e30)
    row_max = jnp.max(masked, axis=-1, keepdims=True)
    p = jnp.where(mask, jnp.exp(masked - row_max), 0.0)
    denom = jnp.sum(p, axis=-1, keepdims=True)
    attn = p * pl.reciprocal(jnp.maximum(denom, 1e-20), approx=True)  # (TB, T)

    # Weighted pooling of the history: VPU multiply + reduction over T.
    user_rep = jnp.sum(hist * attn[:, :, None], axis=1)            # (TB, Dh) f32

    # --- MLP layer 1: W1 split per stream -> four matmuls, one f32 accumulator
    # (identical math to cat(user, item, ctx, user_rep) @ W1, no in-kernel concat).
    acc = jnp.dot(user_ref[...].astype(cdt), w1u_ref[...], preferred_element_type=f32)
    acc = acc + jnp.dot(item_c, w1i_ref[...], preferred_element_type=f32)
    acc = acc + jnp.dot(ctx_ref[...].astype(cdt), w1c_ref[...], preferred_element_type=f32)
    acc = acc + jnp.dot(user_rep.astype(cdt), w1h_ref[...], preferred_element_type=f32)
    h1 = jnp.maximum(acc + b1_ref[...], 0.0)                       # (TB, H1) f32

    h2 = jnp.maximum(jnp.dot(h1.astype(cdt), w2_ref[...], preferred_element_type=f32)
                     + b2_ref[...], 0.0)                           # (TB, H2) f32

    # --- Output layer as VPU multiply + reduce (avoids an N=1 MXU pass) ---
    logit = jnp.sum(h2 * wo_ref[...], axis=-1) + bo_ref[0, 0]      # (TB,)
    out_ref[0, :] = jax.nn.sigmoid(logit)                          # lane-dense store


# ------------------------------- wrapper ----------------------------------- #
@functools.partial(jax.jit, static_argnames=("block_b", "vmem_budget_mb"))
def din_wo_emb_forward(x_user, x_item, x_context, user_hist, hist_len, klg, params,
                       *, block_b=512, vmem_budget_mb=24):
    del klg  # unused by DIN_WOEmb.forward
    (watt, batt, w1_item, w1_user, w1_ctx, w1_hist, b1, w2, b2, wo, bo) = params

    B = x_user.shape[0]
    T = user_hist.shape[1]

    # Field flattening is reshape-only (views); no wrapper cast passes.  History
    # is read in its producer dtype (pass bf16 from upstream to halve HBM bytes;
    # the kernel handles either dtype).
    item = x_item.reshape(B, -1)
    user = x_user.reshape(B, -1)
    ctx = x_context.reshape(B, -1)
    hist = user_hist.reshape(B, T, -1)
    hlen = hist_len.reshape(B, 1).astype(jnp.int32)

    Di, Du, Dc = item.shape[1], user.shape[1], ctx.shape[1]
    Dh = hist.shape[2]
    H1, H2 = w2.shape[0], w2.shape[1]

    weights = (watt, batt, w1_item, w1_user, w1_ctx, w1_hist, b1, w2, b2, wo, bo)

    # --- derive the batch tile from a VMEM budget (conservative across gens) ---
    def _vmem_est(tb):
        dbl = 2  # double-buffered pipeline copies
        stream = dbl * (tb * T * Dh * hist.dtype.itemsize
                        + tb * (Di * item.dtype.itemsize
                                + Du * user.dtype.itemsize
                                + Dc * ctx.dtype.itemsize)
                        + tb * 128 * 4            # hist_len tile (lane padded)
                        + tb * 4)                 # output tile
        wbytes = dbl * sum(int(w.size) * w.dtype.itemsize for w in weights)
        interm = (2 * tb * T * Dh * 4             # hist f32 upcast + mul temp
                  + 5 * tb * max(T, 128) * 4      # scores / mask / p / attn
                  + 2 * tb * (Dh + H1 + H2) * 4)  # proj / user_rep / h1 / h2 (+casts)
        return stream + wbytes + interm

    budget = vmem_budget_mb * 1024 * 1024
    tb = max(128, (block_b // 128) * 128)
    while tb > 128 and _vmem_est(tb) > budget:
        tb = max(128, ((tb // 2) // 128) * 128)

    b8 = ((B + 7) // 8) * 8
    if b8 <= tb:
        tb = b8                     # whole batch in one tile (no 128-lane need)
    padded_B = ((B + tb - 1) // tb) * tb
    pad = padded_B - B
    # NOTE: in production pick B as a multiple of tb so this pad pass (a full
    # HBM read+write of the tail) never materializes.
    if pad:
        item = jnp.pad(item, ((0, pad), (0, 0)))
        user = jnp.pad(user, ((0, pad), (0, 0)))
        ctx = jnp.pad(ctx, ((0, pad), (0, 0)))
        hist = jnp.pad(hist, ((0, pad), (0, 0), (0, 0)))
        hlen = jnp.pad(hlen, ((0, pad), (0, 0)))
    num_tiles = padded_B // tb

    flops = 2 * padded_B * (Di * Dh + 2 * T * Dh
                            + (Di + Du + Dc + Dh) * H1 + H1 * H2 + H2)
    bytes_accessed = (hist.size * hist.dtype.itemsize
                      + item.size * item.dtype.itemsize
                      + user.size * user.dtype.itemsize
                      + ctx.size * ctx.dtype.itemsize
                      + hlen.size * 4 + padded_B * 4
                      + sum(int(w.size) * w.dtype.itemsize for w in weights))
    cost = pl.CostEstimate(flops=int(flops),
                           transcendentals=int(padded_B * (T + 2)),
                           bytes_accessed=int(bytes_accessed))

    def resident(x):  # full-array block, constant index_map -> stays in VMEM
        return pl.BlockSpec(x.shape, lambda b, _n=x.ndim: (0,) * _n)

    grid_spec = pltpu.PrefetchScalarGridSpec(
        num_scalar_prefetch=0,
        grid=(num_tiles,),
        in_specs=[
            pl.BlockSpec((tb, Di), lambda b: (b, 0)),        # item features
            pl.BlockSpec((tb, Du), lambda b: (b, 0)),        # user features
            pl.BlockSpec((tb, Dc), lambda b: (b, 0)),        # context features
            pl.BlockSpec((tb, T, Dh), lambda b: (b, 0, 0)),  # history
            pl.BlockSpec((tb, 1), lambda b: (b, 0)),         # hist_len
            resident(watt), resident(batt),
            resident(w1_item), resident(w1_user), resident(w1_ctx), resident(w1_hist),
            resident(b1), resident(w2), resident(b2), resident(wo),
            pl.BlockSpec(memory_space=pltpu.MemorySpace.SMEM),  # bo scalar
        ],
        out_specs=pl.BlockSpec((1, tb), lambda b: (0, b)),
    )

    vmem_limit = int(min(max(4 * _vmem_est(tb), 32 * 1024 * 1024),
                         48 * 1024 * 1024))

    out = pl.pallas_call(
        din_kernel,
        out_shape=jax.ShapeDtypeStruct((1, padded_B), jnp.float32),
        grid_spec=grid_spec,
        compiler_params=pltpu.CompilerParams(
            dimension_semantics=("parallel",),   # batch axis shards across TCs on v7x
            vmem_limit_bytes=vmem_limit),
        cost_estimate=cost,
    )(item, user, ctx, hist, hlen, *weights)
    return out[0, :B]   # matches .squeeze(1)


# --------------------------- parameter creation ----------------------------- #
def make_params(key, item_dim, user_dim, ctx_dim, hist_dim, hidden_dims,
                weight_dtype=jnp.bfloat16):
    keys = jax.random.split(key, 11)
    s = 0.1
    H1, H2 = hidden_dims
    # MXU matmul weights in bf16 (resident in VMEM); biases / output vector in f32.
    watt = (s * jax.random.normal(keys[0], (item_dim, hist_dim), jnp.float32)).astype(weight_dtype)
    batt = s * jax.random.normal(keys[1], (1, hist_dim), jnp.float32)
    w1_item = (s * jax.random.normal(keys[2], (item_dim, H1), jnp.float32)).astype(weight_dtype)
    w1_user = (s * jax.random.normal(keys[3], (user_dim, H1), jnp.float32)).astype(weight_dtype)
    w1_ctx = (s * jax.random.normal(keys[4], (ctx_dim, H1), jnp.float32)).astype(weight_dtype)
    w1_hist = (s * jax.random.normal(keys[5], (hist_dim, H1), jnp.float32)).astype(weight_dtype)
    b1 = s * jax.random.normal(keys[6], (1, H1), jnp.float32)
    w2 = (s * jax.random.normal(keys[7], (H1, H2), jnp.float32)).astype(weight_dtype)
    b2 = s * jax.random.normal(keys[8], (1, H2), jnp.float32)
    wo = s * jax.random.normal(keys[9], (1, H2), jnp.float32)   # row vector
    bo = s * jax.random.normal(keys[10], (1, 1), jnp.float32)
    return (watt, batt, w1_item, w1_user, w1_ctx, w1_hist, b1, w2, b2, wo, bo)


if __name__ == "__main__":
    # small, DIN-consistent config
    B = 8
    embed_dim = 16
    user_num_fields = 2
    item_num_fields = 3
    context_num_fields = 1
    hist_num_fields = 3
    T = 8
    hidden_dims = (64, 32)

    item_dim = item_num_fields * embed_dim        # 48
    user_dim = user_num_fields * embed_dim        # 32
    ctx_dim = context_num_fields * embed_dim      # 16
    hist_dim = hist_num_fields * embed_dim        # 48

    key = jax.random.PRNGKey(0)
    k_u, k_i, k_c, k_h, k_l, k_p = jax.random.split(key, 6)

    x_user = jax.random.normal(k_u, (B, user_num_fields, embed_dim), jnp.float32)
    x_item = jax.random.normal(k_i, (B, item_num_fields, embed_dim), jnp.float32)
    x_context = jax.random.normal(k_c, (B, context_num_fields, embed_dim), jnp.float32)
    user_hist = jax.random.normal(k_h, (B, T, hist_num_fields, embed_dim), jnp.float32)
    hist_len = jax.random.randint(k_l, (B,), 1, T + 1, jnp.int32)
    klg = jnp.zeros((B, 1), jnp.float32)          # unused by the forward pass

    params = make_params(k_p, item_dim, user_dim, ctx_dim, hist_dim, hidden_dims)

    out = din_wo_emb_forward(x_user, x_item, x_context, user_hist, hist_len, klg, params)
    out = jax.block_until_ready(out)
    assert out.shape == (B,)
    assert bool(jnp.all(jnp.isfinite(out)))
    assert bool(jnp.all((out >= 0.0) & (out <= 1.0)))
    print("KERNEL_OK")
</pallas_src>

<mosaic_0001>
module attributes {stable_mosaic.version = 11 : i64} {
  func.func @din_kernel(%arg0: i32, %arg1: memref<8x48xf32, #tpu.memory_space<vmem>>, %arg2: memref<8x32xf32, #tpu.memory_space<vmem>>, %arg3: memref<8x16xf32, #tpu.memory_space<vmem>>, %arg4: memref<8x8x48xf32, #tpu.memory_space<vmem>>, %arg5: memref<8x1xi32, #tpu.memory_space<vmem>>, %arg6: memref<48x48xbf16, #tpu.memory_space<vmem>>, %arg7: memref<1x48xf32, #tpu.memory_space<vmem>>, %arg8: memref<48x64xbf16, #tpu.memory_space<vmem>>, %arg9: memref<32x64xbf16, #tpu.memory_space<vmem>>, %arg10: memref<16x64xbf16, #tpu.memory_space<vmem>>, %arg11: memref<48x64xbf16, #tpu.memory_space<vmem>>, %arg12: memref<1x64xf32, #tpu.memory_space<vmem>>, %arg13: memref<64x32xbf16, #tpu.memory_space<vmem>>, %arg14: memref<1x32xf32, #tpu.memory_space<vmem>>, %arg15: memref<1x32xf32, #tpu.memory_space<vmem>>, %arg16: memref<1x1xf32, #tpu.memory_space<smem>>, %arg17: memref<1x8xf32, #tpu.memory_space<vmem>>) attributes {dimension_semantics = [#tpu.dimension_semantics<parallel>], iteration_bounds = array<i64: 1>, scalar_prefetch = 0 : i64, scratch_operands = 0 : i64, tpu.core_type = #tpu.core_type<tc>, window_params = [{transform_indices = @transform_0, window_bounds = array<i64: 8, 48>}, {transform_indices = @transform_1, window_bounds = array<i64: 8, 32>}, {transform_indices = @transform_2, window_bounds = array<i64: 8, 16>}, {transform_indices = @transform_3, window_bounds = array<i64: 8, 8, 48>}, {transform_indices = @transform_4, window_bounds = array<i64: 8, 1>}, {pipeline_mode = #tpu.pipeline_mode<synchronous>, transform_indices = @transform_5, window_bounds = array<i64: 48, 48>}, {pipeline_mode = #tpu.pipeline_mode<synchronous>, transform_indices = @transform_6, window_bounds = array<i64: 1, 48>}, {pipeline_mode = #tpu.pipeline_mode<synchronous>, transform_indices = @transform_7, window_bounds = array<i64: 48, 64>}, {pipeline_mode = #tpu.pipeline_mode<synchronous>, transform_indices = @transform_8, window_bounds = array<i64: 32, 64>}, {pipeline_mode = #tpu.pipeline_mode<synchronous>, transform_indices = @transform_9, window_bounds = array<i64: 16, 64>}, {pipeline_mode = #tpu.pipeline_mode<synchronous>, transform_indices = @transform_10, window_bounds = array<i64: 48, 64>}, {pipeline_mode = #tpu.pipeline_mode<synchronous>, transform_indices = @transform_11, window_bounds = array<i64: 1, 64>}, {pipeline_mode = #tpu.pipeline_mode<synchronous>, transform_indices = @transform_12, window_bounds = array<i64: 64, 32>}, {pipeline_mode = #tpu.pipeline_mode<synchronous>, transform_indices = @transform_13, window_bounds = array<i64: 1, 32>}, {pipeline_mode = #tpu.pipeline_mode<synchronous>, transform_indices = @transform_14, window_bounds = array<i64: 1, 32>}, {transform_indices = @transform_15, window_bounds = array<i64: 1, 1>}, {transform_indices = @transform_16, window_bounds = array<i64: 1, 8>}]} {
    %c0 = arith.constant 0 : index
    %c0_0 = arith.constant 0 : index
    %0 = vector.load %arg1[%c0, %c0_0] : memref<8x48xf32, #tpu.memory_space<vmem>>, vector<8x48xf32>
    %1 = arith.truncf %0 : vector<8x48xf32> to vector<8x48xbf16>
    %c0_1 = arith.constant 0 : index
    %c0_2 = arith.constant 0 : index
    %2 = vector.load %arg6[%c0_1, %c0_2] : memref<48x48xbf16, #tpu.memory_space<vmem>>, vector<48x48xbf16>
    %cst = arith.constant dense<0.000000e+00> : vector<8x48xf32>
    %3 = tpu.matmul %1, %2, %cst {dimension_numbers = #tpu.dot_dimension_numbers<[1], [0], [0], [1], [0, 0, 1, 1], [], []>} : vector<8x48xbf16>, vector<48x48xbf16>, vector<8x48xf32> -> vector<8x48xf32>
    %c0_3 = arith.constant 0 : index
    %c0_4 = arith.constant 0 : index
    %4 = vector.load %arg7[%c0_3, %c0_4] : memref<1x48xf32, #tpu.memory_space<vmem>>, vector<1x48xf32>
    %5 = vector.broadcast %4 : vector<1x48xf32> to vector<8x48xf32>
    %6 = arith.addf %3, %5 : vector<8x48xf32>
    %c0_5 = arith.constant 0 : index
    %c0_6 = arith.constant 0 : index
    %c0_7 = arith.constant 0 : index
    %7 = vector.load %arg4[%c0_5, %c0_6, %c0_7] : memref<8x8x48xf32, #tpu.memory_space<vmem>>, vector<8x8x48xf32>
    %8 = vector.shape_cast %6 : vector<8x48xf32> to vector<8x1x48xf32>
    %9 = vector.broadcast %8 : vector<8x1x48xf32> to vector<8x8x48xf32>
    %10 = arith.mulf %7, %9 : vector<8x8x48xf32>
    %cst_8 = arith.constant dense<0.000000e+00> : vector<8x8xf32>
    %11 = vector.multi_reduction <add>, %10, %cst_8 [2] : vector<8x8x48xf32> to vector<8x8xf32>
    %12 = tpu.iota {dimensions = array<i32: 1>} : vector<8x8xi32>
    %c0_9 = arith.constant 0 : index
    %c0_10 = arith.constant 0 : index
    %13 = vector.load %arg5[%c0_9, %c0_10] : memref<8x1xi32, #tpu.memory_space<vmem>>, vector<8x1xi32>
    %14 = vector.broadcast %13 : vector<8x1xi32> to vector<8x8xi32>
    %15 = arith.cmpi slt, %12, %14 : vector<8x8xi32>
    %cst_11 = arith.constant -1.000000e+30 : f32
    %16 = vector.broadcast %cst_11 : f32 to vector<8x8xf32>
    %17 = arith.select %15, %11, %16 : vector<8x8xi1>, vector<8x8xf32>
    %cst_12 = arith.constant dense<0xFF800000> : vector<8xf32>
    %18 = vector.multi_reduction <maximumf>, %17, %cst_12 [1] : vector<8x8xf32> to vector<8xf32>
    %19 = vector.shape_cast %18 : vector<8xf32> to vector<8x1xf32>
    %20 = vector.broadcast %19 : vector<8x1xf32> to vector<8x8xf32>
    %21 = arith.subf %17, %20 : vector<8x8xf32>
    %22 = math.exp %21 : vector<8x8xf32>
    %cst_13 = arith.constant 0.000000e+00 : f32
    %23 = vector.broadcast %cst_13 : f32 to vector<8x8xf32>
    %24 = arith.select %15, %22, %23 : vector<8x8xi1>, vector<8x8xf32>
    %cst_14 = arith.constant dense<0.000000e+00> : vector<8xf32>
    %25 = vector.multi_reduction <add>, %24, %cst_14 [1] : vector<8x8xf32> to vector<8xf32>
    %26 = vector.shape_cast %25 : vector<8xf32> to vector<8x1xf32>
    %cst_15 = arith.constant 9.99999968E-21 : f32
    %27 = vector.broadcast %cst_15 : f32 to vector<8x1xf32>
    %28 = arith.maximumf %26, %27 : vector<8x1xf32>
    %29 = tpu.reciprocal %28 {approx = true} : vector<8x1xf32> -> vector<8x1xf32>
    %30 = vector.broadcast %29 : vector<8x1xf32> to vector<8x8xf32>
    %31 = arith.mulf %24, %30 : vector<8x8xf32>
    %32 = vector.shape_cast %31 : vector<8x8xf32> to vector<8x8x1xf32>
    %33 = vector.broadcast %32 : vector<8x8x1xf32> to vector<8x8x48xf32>
    %34 = arith.mulf %7, %33 : vector<8x8x48xf32>
    %cst_16 = arith.constant dense<0.000000e+00> : vector<8x48xf32>
    %35 = vector.multi_reduction <add>, %34, %cst_16 [1] : vector<8x8x48xf32> to vector<8x48xf32>
    %c0_17 = arith.constant 0 : index
    %c0_18 = arith.constant 0 : index
    %36 = vector.load %arg2[%c0_17, %c0_18] : memref<8x32xf32, #tpu.memory_space<vmem>>, vector<8x32xf32>
    %37 = arith.truncf %36 : vector<8x32xf32> to vector<8x32xbf16>
    %c0_19 = arith.constant 0 : index
    %c0_20 = arith.constant 0 : index
    %38 = vector.load %arg9[%c0_19, %c0_20] : memref<32x64xbf16, #tpu.memory_space<vmem>>, vector<32x64xbf16>
    %cst_21 = arith.constant dense<0.000000e+00> : vector<8x64xf32>
    %39 = tpu.matmul %37, %38, %cst_21 {dimension_numbers = #tpu.dot_dimension_numbers<[1], [0], [0], [1], [0, 0, 1, 1], [], []>} : vector<8x32xbf16>, vector<32x64xbf16>, vector<8x64xf32> -> vector<8x64xf32>
    %c0_22 = arith.constant 0 : index
    %c0_23 = arith.constant 0 : index
    %40 = vector.load %arg8[%c0_22, %c0_23] : memref<48x64xbf16, #tpu.memory_space<vmem>>, vector<48x64xbf16>
    %cst_24 = arith.constant dense<0.000000e+00> : vector<8x64xf32>
    %41 = tpu.matmul %1, %40, %cst_24 {dimension_numbers = #tpu.dot_dimension_numbers<[1], [0], [0], [1], [0, 0, 1, 1], [], []>} : vector<8x48xbf16>, vector<48x64xbf16>, vector<8x64xf32> -> vector<8x64xf32>
    %42 = arith.addf %39, %41 : vector<8x64xf32>
    %c0_25 = arith.constant 0 : index
    %c0_26 = arith.constant 0 : index
    %43 = vector.load %arg3[%c0_25, %c0_26] : memref<8x16xf32, #tpu.memory_space<vmem>>, vector<8x16xf32>
    %44 = arith.truncf %43 : vector<8x16xf32> to vector<8x16xbf16>
    %c0_27 = arith.constant 0 : index
    %c0_28 = arith.constant 0 : index
    %45 = vector.load %arg10[%c0_27, %c0_28] : memref<16x64xbf16, #tpu.memory_space<vmem>>, vector<16x64xbf16>
    %cst_29 = arith.constant dense<0.000000e+00> : vector<8x64xf32>
    %46 = tpu.matmul %44, %45, %cst_29 {dimension_numbers = #tpu.dot_dimension_numbers<[1], [0], [0], [1], [0, 0, 1, 1], [], []>} : vector<8x16xbf16>, vector<16x64xbf16>, vector<8x64xf32> -> vector<8x64xf32>
    %47 = arith.addf %42, %46 : vector<8x64xf32>
    %48 = arith.truncf %35 : vector<8x48xf32> to vector<8x48xbf16>
    %c0_30 = arith.constant 0 : index
    %c0_31 = arith.constant 0 : index
    %49 = vector.load %arg11[%c0_30, %c0_31] : memref<48x64xbf16, #tpu.memory_space<vmem>>, vector<48x64xbf16>
    %cst_32 = arith.constant dense<0.000000e+00> : vector<8x64xf32>
    %50 = tpu.matmul %48, %49, %cst_32 {dimension_numbers = #tpu.dot_dimension_numbers<[1], [0], [0], [1], [0, 0, 1, 1], [], []>} : vector<8x48xbf16>, vector<48x64xbf16>, vector<8x64xf32> -> vector<8x64xf32>
    %51 = arith.addf %47, %50 : vector<8x64xf32>
    %c0_33 = arith.constant 0 : index
    %c0_34 = arith.constant 0 : index
    %52 = vector.load %arg12[%c0_33, %c0_34] : memref<1x64xf32, #tpu.memory_space<vmem>>, vector<1x64xf32>
    %53 = vector.broadcast %52 : vector<1x64xf32> to vector<8x64xf32>
    %54 = arith.addf %51, %53 : vector<8x64xf32>
    %cst_35 = arith.constant 0.000000e+00 : f32
    %55 = vector.broadcast %cst_35 : f32 to vector<8x64xf32>
    %56 = arith.maximumf %54, %55 : vector<8x64xf32>
    %57 = arith.truncf %56 : vector<8x64xf32> to vector<8x64xbf16>
    %c0_36 = arith.constant 0 : index
    %c0_37 = arith.constant 0 : index
    %58 = vector.load %arg13[%c0_36, %c0_37] : memref<64x32xbf16, #tpu.memory_space<vmem>>, vector<64x32xbf16>
    %cst_38 = arith.constant dense<0.000000e+00> : vector<8x32xf32>
    %59 = tpu.matmul %57, %58, %cst_38 {dimension_numbers = #tpu.dot_dimension_numbers<[1], [0], [0], [1], [0, 0, 1, 1], [], []>} : vector<8x64xbf16>, vector<64x32xbf16>, vector<8x32xf32> -> vector<8x32xf32>
    %c0_39 = arith.constant 0 : index
    %c0_40 = arith.constant 0 : index
    %60 = vector.load %arg14[%c0_39, %c0_40] : memref<1x32xf32, #tpu.memory_space<vmem>>, vector<1x32xf32>
    %61 = vector.broadcast %60 : vector<1x32xf32> to vector<8x32xf32>
    %62 = arith.addf %59, %61 : vector<8x32xf32>
    %cst_41 = arith.constant 0.000000e+00 : f32
    %63 = vector.broadcast %cst_41 : f32 to vector<8x32xf32>
    %64 = arith.maximumf %62, %63 : vector<8x32xf32>
    %c0_42 = arith.constant 0 : index
    %c0_43 = arith.constant 0 : index
    %65 = vector.load %arg15[%c0_42, %c0_43] : memref<1x32xf32, #tpu.memory_space<vmem>>, vector<1x32xf32>
    %66 = vector.broadcast %65 : vector<1x32xf32> to vector<8x32xf32>
    %67 = arith.mulf %64, %66 : vector<8x32xf32>
    %cst_44 = arith.constant dense<0.000000e+00> : vector<8xf32>
    %68 = vector.multi_reduction <add>, %67, %cst_44 [1] : vector<8x32xf32> to vector<8xf32>
    %c0_45 = arith.constant 0 : index
    %c0_46 = arith.constant 0 : index
    %69 = memref.load %arg16[%c0_45, %c0_46] : memref<1x1xf32, #tpu.memory_space<smem>>
    %70 = vector.broadcast %69 : f32 to vector<8xf32>
    %71 = arith.addf %68, %70 : vector<8xf32>
    %72 = arith.negf %71 : vector<8xf32>
    %73 = math.exp %72 : vector<8xf32>
    %cst_47 = arith.constant 1.000000e+00 : f32
    %74 = vector.broadcast %cst_47 : f32 to vector<8xf32>
    %75 = arith.addf %74, %73 : vector<8xf32>
    %76 = arith.divf %74, %75 : vector<8xf32>
    %c0_48 = arith.constant 0 : index
    %c0_49 = arith.constant 0 : index
    %77 = vector.load %arg17[%c0_48, %c0_49] : memref<1x8xf32, #tpu.memory_space<vmem>>, vector<1x8xf32>
    %78 = vector.shape_cast %77 : vector<1x8xf32> to vector<8xf32>
    %79 = vector.shape_cast %76 : vector<8xf32> to vector<1x8xf32>
    tpu.vector_store %arg17[%c0_48, %c0_49], %79 {strides = array<i32>} : memref<1x8xf32, #tpu.memory_space<vmem>>, vector<1x8xf32>,
    return
  }
  func.func @transform_0(%arg0: i32) -> (i32, i32) {
    %c0_i32 = arith.constant 0 : i32
    %c0_i32_0 = arith.constant 0 : i32
    return %arg0, %c0_i32 : i32, i32
  }
  func.func @transform_1(%arg0: i32) -> (i32, i32) {
    %c0_i32 = arith.constant 0 : i32
    %c0_i32_0 = arith.constant 0 : i32
    return %arg0, %c0_i32 : i32, i32
  }
  func.func @transform_2(%arg0: i32) -> (i32, i32) {
    %c0_i32 = arith.constant 0 : i32
    %c0_i32_0 = arith.constant 0 : i32
    return %arg0, %c0_i32 : i32, i32
  }
  func.func @transform_3(%arg0: i32) -> (i32, i32, i32) {
    %c0_i32 = arith.constant 0 : i32
    %c0_i32_0 = arith.constant 0 : i32
    %c0_i32_1 = arith.constant 0 : i32
    return %arg0, %c0_i32, %c0_i32_0 : i32, i32, i32
  }
  func.func @transform_4(%arg0: i32) -> (i32, i32) {
    %c0_i32 = arith.constant 0 : i32
    %c0_i32_0 = arith.constant 0 : i32
    return %arg0, %c0_i32 : i32, i32
  }
  func.func @transform_5(%arg0: i32) -> (i32, i32) {
    %c0_i32 = arith.constant 0 : i32
    %c0_i32_0 = arith.constant 0 : i32
    %c0_i32_1 = arith.constant 0 : i32
    return %c0_i32, %c0_i32_0 : i32, i32
  }
  func.func @transform_6(%arg0: i32) -> (i32, i32) {
    %c0_i32 = arith.constant 0 : i32
    %c0_i32_0 = arith.constant 0 : i32
    %c0_i32_1 = arith.constant 0 : i32
    return %c0_i32, %c0_i32_0 : i32, i32
  }
  func.func @transform_7(%arg0: i32) -> (i32, i32) {
    %c0_i32 = arith.constant 0 : i32
    %c0_i32_0 = arith.constant 0 : i32
    %c0_i32_1 = arith.constant 0 : i32
    return %c0_i32, %c0_i32_0 : i32, i32
  }
  func.func @transform_8(%arg0: i32) -> (i32, i32) {
    %c0_i32 = arith.constant 0 : i32
    %c0_i32_0 = arith.constant 0 : i32
    %c0_i32_1 = arith.constant 0 : i32
    return %c0_i32, %c0_i32_0 : i32, i32
  }
  func.func @transform_9(%arg0: i32) -> (i32, i32) {
    %c0_i32 = arith.constant 0 : i32
    %c0_i32_0 = arith.constant 0 : i32
    %c0_i32_1 = arith.constant 0 : i32
    return %c0_i32, %c0_i32_0 : i32, i32
  }
  func.func @transform_10(%arg0: i32) -> (i32, i32) {
    %c0_i32 = arith.constant 0 : i32
    %c0_i32_0 = arith.constant 0 : i32
    %c0_i32_1 = arith.constant 0 : i32
    return %c0_i32, %c0_i32_0 : i32, i32
  }
  func.func @transform_11(%arg0: i32) -> (i32, i32) {
    %c0_i32 = arith.constant 0 : i32
    %c0_i32_0 = arith.constant 0 : i32
    %c0_i32_1 = arith.constant 0 : i32
    return %c0_i32, %c0_i32_0 : i32, i32
  }
  func.func @transform_12(%arg0: i32) -> (i32, i32) {
    %c0_i32 = arith.constant 0 : i32
    %c0_i32_0 = arith.constant 0 : i32
    %c0_i32_1 = arith.constant 0 : i32
    return %c0_i32, %c0_i32_0 : i32, i32
  }
  func.func @transform_13(%arg0: i32) -> (i32, i32) {
    %c0_i32 = arith.constant 0 : i32
    %c0_i32_0 = arith.constant 0 : i32
    %c0_i32_1 = arith.constant 0 : i32
    return %c0_i32, %c0_i32_0 : i32, i32
  }
  func.func @transform_14(%arg0: i32) -> (i32, i32) {
    %c0_i32 = arith.constant 0 : i32
    %c0_i32_0 = arith.constant 0 : i32
    %c0_i32_1 = arith.constant 0 : i32
    return %c0_i32, %c0_i32_0 : i32, i32
  }
  func.func @transform_15(%arg0: i32) -> (i32, i32) {
    %c0_i32 = arith.constant 0 : i32
    %c0_i32_0 = arith.constant 0 : i32
    %c0_i32_1 = arith.constant 0 : i32
    return %c0_i32, %c0_i32_0 : i32, i32
  }
  func.func @transform_16(%arg0: i32) -> (i32, i32) {
    %c0_i32 = arith.constant 0 : i32
    %c0_i32_0 = arith.constant 0 : i32
    return %c0_i32, %arg0 : i32, i32
  }
}

</mosaic_0001>

<llo_original>
// kernel: din_wo_emb_forward.1
$region0: #{din_wo_emb_forward.1}
  #allocation0 [shape = 'u32[]', space=smem, size = 0x4, offset = 0x4, fixed_abs, tag = 'smem constant byte address 0x4 - core index']
  #allocation1 [shape = 'u32[144,128]{1,0:T(1,128)}', space=vmem, size = 0x12000, scoped, tag = 'internal scratch']
  #allocation2 [shape = 'f32[1,1]{1,0:T(1,128)S(6)}', space=smem, size = 0x200, scoped, tag = 'scoped memory for din_wo_emb_forward.1']
  %s0 = inlined_call_operand.vmem [shape: f32[8,48], index: 0, kind: input, shape index: {}]
  %s1 = inlined_call_operand.vmem [shape: f32[8,32], index: 1, kind: input, shape index: {}]
  %s2 = inlined_call_operand.vmem [shape: f32[8,16], index: 2, kind: input, shape index: {}]
  %s3 = inlined_call_operand.vmem [shape: f32[8,8,48], index: 3, kind: input, shape index: {}]
  %s4 = inlined_call_operand.vmem [shape: s32[8,1], index: 4, kind: input, shape index: {}]
  %s5 = inlined_call_operand.vmem [shape: bf16[48,48], index: 5, kind: input, shape index: {}]
  %s6 = inlined_call_operand.vmem [shape: f32[1,48], index: 6, kind: input, shape index: {}]
  %s7 = inlined_call_operand.vmem [shape: bf16[48,64], index: 7, kind: input, shape index: {}]
  %s8 = inlined_call_operand.vmem [shape: bf16[32,64], index: 8, kind: input, shape index: {}]
  %s9 = inlined_call_operand.vmem [shape: bf16[16,64], index: 9, kind: input, shape index: {}]
  %s10 = inlined_call_operand.vmem [shape: bf16[48,64], index: 10, kind: input, shape index: {}]
  %s11 = inlined_call_operand.vmem [shape: f32[1,64], index: 11, kind: input, shape index: {}]
  %s12 = inlined_call_operand.vmem [shape: bf16[64,32], index: 12, kind: input, shape index: {}]
  %s13 = inlined_call_operand.vmem [shape: f32[1,32], index: 13, kind: input, shape index: {}]
  %s14 = inlined_call_operand.vmem [shape: f32[1,32], index: 14, kind: input, shape index: {}]
  %s15 = inlined_call_operand.<no memory space> [shape: f32[1,1], index: 15, kind: input, shape index: {}]
  %s16 = inlined_call_operand.hbm [shape: f32[1,8], index: 16, kind: output, shape index: {}]
  %s17 = sld [smem:[#allocation0]]
  $region74: #{din_wo_emb_forward.1} parent=0
    _
  %s19 = ssub.s32 1, %s17
  %s20 = scalar_select 0, %s19, %s17
  %21 = sst [smem:[#allocation2]] %s15
  $region1: #{din_wo_emb_forward.1} parent=0
    #allocation3 [shape = 'u8[512]{0}', space=vmem, size = 0x400, scoped, tag = 'output window, operand 0, single buffered']
    #allocation4 [shape = 's32[1]{0}', space=sflag, size = 0x4, scoped, tag = 'scoped memory for din_wo_emb_forward.1']
    %22 = vsyncpa [#allocation4], 0
    // Predicated region
    $region2: #{din_wo_emb_forward.1} parent=1 // pred_check
      _
    $region3: #{din_wo_emb_forward.1} parent=1 // pred_check_branch
      %24 = sbr.rel (0) target = $region5
    $region4: #{din_wo_emb_forward.1} parent=1 // pred_region
      _
    $region5: #{din_wo_emb_forward.1} parent=1 // pred_fallthru
      _
    // Predicated region
    $region6: #{din_wo_emb_forward.1} parent=1 // pred_check
      _
    $region7: #{din_wo_emb_forward.1} parent=1 // pred_check_branch
      %26 = sbr.rel (0) target = $region9
    $region8: #{din_wo_emb_forward.1} parent=1 // pred_region
      _
    $region9: #{din_wo_emb_forward.1} parent=1 // pred_fallthru
      _
    // Predicated region
    $region10: #{din_wo_emb_forward.1} parent=1 // pred_check
      _
    $region11: #{din_wo_emb_forward.1} parent=1 // pred_check_branch
      %28 = sbr.rel (0) target = $region13
    $region12: #{din_wo_emb_forward.1} parent=1 // pred_region
      _
    $region13: #{din_wo_emb_forward.1} parent=1 // pred_fallthru
      _
    // Predicated region
    $region14: #{din_wo_emb_forward.1} parent=1 // pred_check
      _
    $region15: #{din_wo_emb_forward.1} parent=1 // pred_check_branch
      %30 = sbr.rel (0) target = $region17
    $region16: #{din_wo_emb_forward.1} parent=1 // pred_region
      _
    $region17: #{din_wo_emb_forward.1} parent=1 // pred_fallthru
      _
    // Predicated region
    $region18: #{din_wo_emb_forward.1} parent=1 // pred_check
      _
    $region19: #{din_wo_emb_forward.1} parent=1 // pred_check_branch
      %32 = sbr.rel (0) target = $region21
    $region20: #{din_wo_emb_forward.1} parent=1 // pred_region
      _
    $region21: #{din_wo_emb_forward.1} parent=1 // pred_fallthru
      _
    // Predicated region
    $region22: #{din_wo_emb_forward.1} parent=1 // pred_check
      _
    $region23: #{din_wo_emb_forward.1} parent=1 // pred_check_branch
      %34 = sbr.rel (0) target = $region25
    $region24: #{din_wo_emb_forward.1} parent=1 // pred_region
      _
    $region25: #{din_wo_emb_forward.1} parent=1 // pred_fallthru
      _
    // Predicated region
    $region26: #{din_wo_emb_forward.1} parent=1 // pred_check
      _
    $region27: #{din_wo_emb_forward.1} parent=1 // pred_check_branch
      %36 = sbr.rel (0) target = $region29
    $region28: #{din_wo_emb_forward.1} parent=1 // pred_region
      _
    $region29: #{din_wo_emb_forward.1} parent=1 // pred_fallthru
      _
    // Predicated region
    $region30: #{din_wo_emb_forward.1} parent=1 // pred_check
      _
    $region31: #{din_wo_emb_forward.1} parent=1 // pred_check_branch
      %38 = sbr.rel (0) target = $region33
    $region32: #{din_wo_emb_forward.1} parent=1 // pred_region
      _
    $region33: #{din_wo_emb_forward.1} parent=1 // pred_fallthru
      _
    // Predicated region
    $region34: #{din_wo_emb_forward.1} parent=1 // pred_check
      _
    $region35: #{din_wo_emb_forward.1} parent=1 // pred_check_branch
      %40 = sbr.rel (0) target = $region37
    $region36: #{din_wo_emb_forward.1} parent=1 // pred_region
      _
    $region37: #{din_wo_emb_forward.1} parent=1 // pred_fallthru
      _
    // Predicated region
    $region38: #{din_wo_emb_forward.1} parent=1 // pred_check
      _
    $region39: #{din_wo_emb_forward.1} parent=1 // pred_check_branch
      %42 = sbr.rel (0) target = $region41
    $region40: #{din_wo_emb_forward.1} parent=1 // pred_region
      _
    $region41: #{din_wo_emb_forward.1} parent=1 // pred_fallthru
      _
    // Predicated region
    $region42: #{din_wo_emb_forward.1} parent=1 // pred_check
      _
    $region43: #{din_wo_emb_forward.1} parent=1 // pred_check_branch
      %44 = sbr.rel (0) target = $region45
    $region44: #{din_wo_emb_forward.1} parent=1 // pred_region
      _
    $region45: #{din_wo_emb_forward.1} parent=1 // pred_fallthru
      _
    // Predicated region
    $region46: #{din_wo_emb_forward.1} parent=1 // pred_check
      _
    $region47: #{din_wo_emb_forward.1} parent=1 // pred_check_branch
      %46 = sbr.rel (0) target = $region49
    $region48: #{din_wo_emb_forward.1} parent=1 // pred_region
      _
    $region49: #{din_wo_emb_forward.1} parent=1 // pred_fallthru
      _
    // Predicated region
    $region50: #{din_wo_emb_forward.1} parent=1 // pred_check
      _
    $region51: #{din_wo_emb_forward.1} parent=1 // pred_check_branch
      %48 = sbr.rel (0) target = $region53
    $region52: #{din_wo_emb_forward.1} parent=1 // pred_region
      _
    $region53: #{din_wo_emb_forward.1} parent=1 // pred_fallthru
      _
    // Predicated region
    $region54: #{din_wo_emb_forward.1} parent=1 // pred_check
      _
    $region55: #{din_wo_emb_forward.1} parent=1 // pred_check_branch
      %50 = sbr.rel (0) target = $region57
    $region56: #{din_wo_emb_forward.1} parent=1 // pred_region
      _
    $region57: #{din_wo_emb_forward.1} parent=1 // pred_fallthru
      _
    // Predicated region
    $region58: #{din_wo_emb_forward.1} parent=1 // pred_check
      _
    $region59: #{din_wo_emb_forward.1} parent=1 // pred_check_branch
      %52 = sbr.rel (0) target = $region61
    $region60: #{din_wo_emb_forward.1} parent=1 // pred_region
      _
    $region61: #{din_wo_emb_forward.1} parent=1 // pred_fallthru
      _
    // Predicated region
    $region62: #{din_wo_emb_forward.1} parent=1 // pred_check
      _
    $region63: #{din_wo_emb_forward.1} parent=1 // pred_check_branch
      %54 = sbr.rel (0) target = $region65
    $region64: #{din_wo_emb_forward.1} parent=1 // pred_region
      _
    $region65: #{din_wo_emb_forward.1} parent=1 // pred_fallthru
      _
    %v56 = vld [vmem:[%s0] sm:$0xff]
    %v57 = vpack.c.bf16 %v56, %v56
    %v58 = vld [vmem:[%s5] sm:$0xf]
    %v59 = vld [vmem:[%s5 + $0x4] sm:$0xf]
    %v60 = vld [vmem:[%s5 + $0x8] sm:$0xf]
    %v61 = vld [vmem:[%s5 + $0xc] sm:$0xf]
    %v62 = vld [vmem:[%s5 + $0x10] sm:$0xf]
    %v63 = vld [vmem:[%s5 + $0x14] sm:$0xf]
    %v64 = vld [vmem:[%s6] sm:$0x1]
    %v66 = vlaneseq
    %v67 = vshrl.u32 %v66, 7
    %v68 = vsub.s32 0, %v67
    %v69 = vrot.slane %v64, %v68
    %v77 = vunpack.c.l.b16 %v58
    %v78 = vunpack.c.l.b16 %v59
    %v79 = vunpack.c.l.b16 %v60
    %v80 = vunpack.c.l.b16 %v61
    %v81 = vunpack.c.l.b16 %v62
    %v82 = vunpack.c.l.b16 %v63
    %v83 = vpack.c.b16 %v78, %v77
    %v84 = vpack.c.b16 %v80, %v79
    %v85 = vpack.c.b16 %v82, %v81
    %vm89 = vcmask 392192
    %v91 = vsel %vm89, %v57, 0
    %93 = vmatprep.subr.bf16.mxu0 0
    %94 = vmatpush1.bf16.msra.mxu0 %v83
    %95 = vmatprep.subr.bf16.mxu0 0
    %96 = vmatpush1.bf16.msra.mxu0 %v84
    %97 = vmatprep.subr.bf16.mxu0 0
    %98 = vmatpush1.bf16.msra.mxu0 %v85
    %99 = vmatprep.subr.bf16.mxu0 0
    %100 = vmatpush1.bf16.msra.mxu0 0
    %101 = vmatprep.subr.bf16.mxu0 0
    %102 = vmatpush1.bf16.msra.mxu0 0
    %103 = vmatprep.subr.bf16.mxu0 0
    %104 = vmatpush1.bf16.msra.mxu0 0
    %105 = vmatprep.subr.bf16.mxu0 0
    %106 = vmatpush1.bf16.msra.mxu0 0
    %107 = vmatprep.subr.bf16.mxu0 0
    %108 = vmatpush1.bf16.msra.mxu0 0
    %109 = vmatprep.subr.bf16.mxu0 0
    %110 = vmatpush1.bf16.msra.mxu0 0
    %111 = vmatprep.subr.bf16.mxu0 0
    %112 = vmatpush1.bf16.msra.mxu0 0
    %113 = vmatprep.subr.bf16.mxu0 0
    %114 = vmatpush1.bf16.msra.mxu0 0
    %115 = vmatprep.subr.bf16.mxu0 0
    %116 = vmatpush1.bf16.msra.mxu0 0
    %117 = vmatprep.subr.bf16.mxu0 0
    %118 = vmatpush1.bf16.msra.mxu0 0
    %119 = vmatprep.subr.bf16.mxu0 0
    %120 = vmatpush1.bf16.msra.mxu0 0
    %121 = vmatprep.subr.bf16.mxu0 0
    %122 = vmatpush1.bf16.msra.mxu0 0
    %123 = vmatprep.subr.bf16.mxu0 0
    %124 = vmatpush1.bf16.msra.mxu0 0
    %125 = vmatprep.mubr.bf16.mxu0 0
    %126 = vmatmul.mubr.bf16.gmra.mrb[0].mxu0 %v91
    %v127 = vpop.f32.mrb[0].mxu0
    %v128 = vadd.f32 %v69, %v127
    %v129 = vpop.f32.mrb[0].mxu0
    %v130 = vpop.f32.mrb[0].mxu0
    %v131 = vpop.f32.mrb[0].mxu0
    %132 = vdwg.mxu0
    %v133 = vld [vmem:[%s3] sm:$0xff]
    %v134 = vld [vmem:[%s3 + $0x8] sm:$0xff]
    %v135 = vld [vmem:[%s3 + $0x10] sm:$0xff]
    %v136 = vld [vmem:[%s3 + $0x18] sm:$0xff]
    %v137 = vld [vmem:[%s3 + $0x20] sm:$0xff]
    %v138 = vld [vmem:[%s3 + $0x28] sm:$0xff]
    %v139 = vld [vmem:[%s3 + $0x30] sm:$0xff]
    %v140 = vld [vmem:[%s3 + $0x38] sm:$0xff]
    %v142 = vcombine.high %v128, %v128
    %v144 = vunpack.c.l.s4 1966171168
    %v145 = vunpack.c.0.s8 %v144
    %v146 = vlaneseq
    %v147 = vshrl.u32 %v146, 7
    %v148 = vsub.s32 %v145, %v147
    %v149 = vrot.slane %v128, %v148
    %v151 = vunpack.c.l.s4 1966171168
    %v152 = vunpack.c.0.s8 %v151
    %v153 = vlaneseq
    %v154 = vshrl.u32 %v153, 7
    %v155 = vsub.s32 %v152, %v154
    %v156 = vrot.slane %v142, %v155
    %v157 = vcombine.high %v149, %v149
    %v158 = vcombine.high %v156, %v156
    %v160 = vunpack.c.l.s4 1966171168
    %v161 = vunpack.c.0.s8 %v160
    %v162 = vlaneseq
    %v163 = vshrl.u32 %v162, 7
    %v164 = vsub.s32 %v161, %v163
    %v165 = vrot.slane %v149, %v164
    %v167 = vunpack.c.l.s4 1966171168
    %v168 = vunpack.c.0.s8 %v167
    %v169 = vlaneseq
    %v170 = vshrl.u32 %v169, 7
    %v171 = vsub.s32 %v168, %v170
    %v172 = vrot.slane %v156, %v171
    %v174 = vunpack.c.l.s4 1966171168
    %v175 = vunpack.c.0.s8 %v174
    %v176 = vlaneseq
    %v177 = vshrl.u32 %v176, 7
    %v178 = vsub.s32 %v175, %v177
    %v179 = vrot.slane %v157, %v178
    %v181 = vunpack.c.l.s4 1966171168
    %v182 = vunpack.c.0.s8 %v181
    %v183 = vlaneseq
    %v184 = vshrl.u32 %v183, 7
    %v185 = vsub.s32 %v182, %v184
    %v186 = vrot.slane %v158, %v185
    %v187 = vcombine.high %v165, %v165
    %v188 = vcombine.high %v172, %v172
    %v189 = vcombine.high %v179, %v179
    %v190 = vcombine.high %v186, %v186
    %v191 = vlaneseq
    %v192 = vshrl.u32 %v191, 7
    %v193 = vsub.s32 0, %v192
    %v194 = vrot.slane %v165, %v193
    %v195 = vlaneseq
    %v196 = vshrl.u32 %v195, 7
    %v197 = vsub.s32 0, %v196
    %v198 = vrot.slane %v179, %v197
    %v199 = vlaneseq
    %v200 = vshrl.u32 %v199, 7
    %v201 = vsub.s32 0, %v200
    %v202 = vrot.slane %v187, %v201
    %v203 = vlaneseq
    %v204 = vshrl.u32 %v203, 7
    %v205 = vsub.s32 0, %v204
    %v206 = vrot.slane %v189, %v205
    %v207 = vlaneseq
    %v208 = vshrl.u32 %v207, 7
    %v209 = vsub.s32 0, %v208
    %v210 = vrot.slane %v172, %v209
    %v211 = vlaneseq
    %v212 = vshrl.u32 %v211, 7
    %v213 = vsub.s32 0, %v212
    %v214 = vrot.slane %v186, %v213
    %v215 = vlaneseq
    %v216 = vshrl.u32 %v215, 7
    %v217 = vsub.s32 0, %v216
    %v218 = vrot.slane %v188, %v217
    %v219 = vlaneseq
    %v220 = vshrl.u32 %v219, 7
    %v221 = vsub.s32 0, %v220
    %v222 = vrot.slane %v190, %v221
    %v231 = vmul.f32 %v133, %v194
    %v232 = vmul.f32 %v134, %v198
    %v233 = vmul.f32 %v135, %v202
    %v234 = vmul.f32 %v136, %v206
    %v235 = vmul.f32 %v137, %v210
    %v236 = vmul.f32 %v138, %v214
    %v237 = vmul.f32 %v139, %v218
    %v238 = vmul.f32 %v140, %v222
    %v239 = vsel %vm89, %v231, 0.0
    %240 = vadd.xlane.f32.xlu0 %v239
    %v241 = vpop.xlane.xlu0 %240
    %v242 = vsel %vm89, %v232, 0.0
    %243 = vadd.xlane.f32.xlu0 %v242
    %v244 = vpop.xlane.xlu0 %243
    %v245 = vsel %vm89, %v233, 0.0
    %246 = vadd.xlane.f32.xlu0 %v245
    %v247 = vpop.xlane.xlu0 %246
    %v248 = vsel %vm89, %v234, 0.0
    %249 = vadd.xlane.f32.xlu0 %v248
    %v250 = vpop.xlane.xlu0 %249
    %v251 = vsel %vm89, %v235, 0.0
    %252 = vadd.xlane.f32.xlu0 %v251
    %v253 = vpop.xlane.xlu0 %252
    %v254 = vsel %vm89, %v236, 0.0
    %255 = vadd.xlane.f32.xlu0 %v254
    %v256 = vpop.xlane.xlu0 %255
    %v257 = vsel %vm89, %v237, 0.0
    %258 = vadd.xlane.f32.xlu0 %v257
    %v259 = vpop.xlane.xlu0 %258
    %v260 = vsel %vm89, %v238, 0.0
    %261 = vadd.xlane.f32.xlu0 %v260
    %v262 = vpop.xlane.xlu0 %261
    %v263 = vlaneseq
    %v264 = vand.u32 %v263, 127
    %v265 = vld [vmem:[%s4] sm:$0xff]
    %266 = vset.pattern.permute.xlu0 0
    %267 = vperm.xlu0 %266, %v265
    %v268 = vpop.permute.xlu0 %267
    %vm269 = vcmp.lt.s32.totalorder %v264, %v268
    %v278 = vlaneseq
    %v279 = vshrl.u32 %v278, 7
    %v280 = vsub.s32 %v264, %v279
    %v281 = vrot.slane %v241, %v280
    %v282 = vlaneseq
    %v283 = vshrl.u32 %v282, 7
    %v284 = vsub.s32 %v264, %v283
    %v285 = vrot.slane %v244, %v284
    %v286 = vlaneseq
    %v287 = vshrl.u32 %v286, 7
    %v288 = vsub.s32 %v264, %v287
    %v289 = vrot.slane %v247, %v288
    %v290 = vlaneseq
    %v291 = vshrl.u32 %v290, 7
    %v292 = vsub.s32 %v264, %v291
    %v293 = vrot.slane %v250, %v292
    %v294 = vlaneseq
    %v295 = vshrl.u32 %v294, 7
    %v296 = vsub.s32 %v264, %v295
    %v297 = vrot.slane %v253, %v296
    %v298 = vlaneseq
    %v299 = vshrl.u32 %v298, 7
    %v300 = vsub.s32 %v264, %v299
    %v301 = vrot.slane %v256, %v300
    %v302 = vlaneseq
    %v303 = vshrl.u32 %v302, 7
    %v304 = vsub.s32 %v264, %v303
    %v305 = vrot.slane %v259, %v304
    %v306 = vlaneseq
    %v307 = vshrl.u32 %v306, 7
    %v308 = vsub.s32 %v264, %v307
    %v309 = vrot.slane %v262, %v308
    %vm310 = vcmask 1041409
    %v311 = vsel %vm310, %v285, %v281
    %vm312 = vcmask 1042434
    %v313 = vsel %vm312, %v289, %v311
    %vm314 = vcmask 1043459
    %v315 = vsel %vm314, %v293, %v313
    %vm316 = vcmask 1044484
    %v317 = vsel %vm316, %v297, %v315
    %vm318 = vcmask 1045509
    %v319 = vsel %vm318, %v301, %v317
    %vm320 = vcmask 1046534
    %v321 = vsel %vm320, %v305, %v319
    %vm322 = vcmask 1047559
    %v323 = vsel %vm322, %v309, %v321
    %v325 = vsel %vm269, %v323, -1e+30
    %vm326 = vcmask 64512
    %v327 = vsel %vm326, %v325, -inf
    %328 = vmax.xlane.f32.xlu0 %v327
    %v329 = vpop.xlane.xlu0 %328
    %v330 = vsub.f32 %v325, %v329
    %v331 = vmul.f32 %v330, 1.442695
    %v332 = vpow.pop %v331
    %v333 = vsel %vm269, %v332, 0.0
    %v334 = vsel %vm326, %v333, 0.0
    %335 = vadd.xlane.f32.xlu0 %v334
    %v336 = vpop.xlane.xlu0 %335
    %v337 = vmax.f32 %v336, 1e-20
    %v338 = vrcp.pop %v337
    %v339 = vmul.f32 %v333, %v338
    %v340 = vlaneseq
    %v341 = vshrl.u32 %v340, 7
    %v342 = vsub.s32 0, %v341
    %v343 = vrot.slane %v339, %v342
    %345 = vbcast.lane.b32.xlu0 %v343, 256
    %v346 = vpop.permute.xlu0 %345
    %v347 = vlaneseq
    %v348 = vshrl.u32 %v347, 7
    %v349 = vsub.s32 1, %v348
    %v350 = vrot.slane %v339, %v349
    %352 = vbcast.lane.b32.xlu0 %v350, 256
    %v353 = vpop.permute.xlu0 %352
    %v354 = vlaneseq
    %v355 = vshrl.u32 %v354, 7
    %v356 = vsub.s32 2, %v355
    %v357 = vrot.slane %v339, %v356
    %359 = vbcast.lane.b32.xlu0 %v357, 256
    %v360 = vpop.permute.xlu0 %359
    %v361 = vlaneseq
    %v362 = vshrl.u32 %v361, 7
    %v363 = vsub.s32 3, %v362
    %v364 = vrot.slane %v339, %v363
    %366 = vbcast.lane.b32.xlu0 %v364, 256
    %v367 = vpop.permute.xlu0 %366
    %v368 = vlaneseq
    %v369 = vshrl.u32 %v368, 7
    %v370 = vsub.s32 4, %v369
    %v371 = vrot.slane %v339, %v370
    %373 = vbcast.lane.b32.xlu0 %v371, 256
    %v374 = vpop.permute.xlu0 %373
    %v375 = vlaneseq
    %v376 = vshrl.u32 %v375, 7
    %v377 = vsub.s32 5, %v376
    %v378 = vrot.slane %v339, %v377
    %380 = vbcast.lane.b32.xlu0 %v378, 256
    %v381 = vpop.permute.xlu0 %380
    %v382 = vlaneseq
    %v383 = vshrl.u32 %v382, 7
    %v384 = vsub.s32 6, %v383
    %v385 = vrot.slane %v339, %v384
    %387 = vbcast.lane.b32.xlu0 %v385, 256
    %v388 = vpop.permute.xlu0 %387
    %v389 = vlaneseq
    %v390 = vshrl.u32 %v389, 7
    %v391 = vsub.s32 7, %v390
    %v392 = vrot.slane %v339, %v391
    %394 = vbcast.lane.b32.xlu0 %v392, 256
    %v395 = vpop.permute.xlu0 %394
    %v396 = vmul.f32 %v133, %v346
    %v397 = vmul.f32 %v134, %v353
    %v398 = vmul.f32 %v135, %v360
    %v399 = vmul.f32 %v136, %v367
    %v400 = vmul.f32 %v137, %v374
    %v401 = vmul.f32 %v138, %v381
    %v402 = vmul.f32 %v139, %v388
    %v403 = vmul.f32 %v140, %v395
    %v404 = vsel %vm89, %v396, 0.0
    %v405 = vrot.slane %v404, 4
    %v406 = vadd.f32 %v404, %v405
    %v407 = vrot.slane %v406, 2
    %v408 = vadd.f32 %v406, %v407
    %v409 = vrot.slane %v408, 1
    %v410 = vadd.f32 %v408, %v409
    %v411 = vsel %vm89, %v397, 0.0
    %v412 = vrot.slane %v411, 4
    %v413 = vadd.f32 %v411, %v412
    %v414 = vrot.slane %v413, 2
    %v415 = vadd.f32 %v413, %v414
    %v416 = vrot.slane %v415, 1
    %v417 = vadd.f32 %v415, %v416
    %v418 = vsel %vm89, %v398, 0.0
    %v419 = vrot.slane %v418, 4
    %v420 = vadd.f32 %v418, %v419
    %v421 = vrot.slane %v420, 2
    %v422 = vadd.f32 %v420, %v421
    %v423 = vrot.slane %v422, 1
    %v424 = vadd.f32 %v422, %v423
    %v425 = vsel %vm89, %v399, 0.0
    %v426 = vrot.slane %v425, 4
    %v427 = vadd.f32 %v425, %v426
    %v428 = vrot.slane %v427, 2
    %v429 = vadd.f32 %v427, %v428
    %v430 = vrot.slane %v429, 1
    %v431 = vadd.f32 %v429, %v430
    %v432 = vsel %vm89, %v400, 0.0
    %v433 = vrot.slane %v432, 4
    %v434 = vadd.f32 %v432, %v433
    %v435 = vrot.slane %v434, 2
    %v436 = vadd.f32 %v434, %v435
    %v437 = vrot.slane %v436, 1
    %v438 = vadd.f32 %v436, %v437
    %v439 = vsel %vm89, %v401, 0.0
    %v440 = vrot.slane %v439, 4
    %v441 = vadd.f32 %v439, %v440
    %v442 = vrot.slane %v441, 2
    %v443 = vadd.f32 %v441, %v442
    %v444 = vrot.slane %v443, 1
    %v445 = vadd.f32 %v443, %v444
    %v446 = vsel %vm89, %v402, 0.0
    %v447 = vrot.slane %v446, 4
    %v448 = vadd.f32 %v446, %v447
    %v449 = vrot.slane %v448, 2
    %v450 = vadd.f32 %v448, %v449
    %v451 = vrot.slane %v450, 1
    %v452 = vadd.f32 %v450, %v451
    %v453 = vsel %vm89, %v403, 0.0
    %v454 = vrot.slane %v453, 4
    %v455 = vadd.f32 %v453, %v454
    %v456 = vrot.slane %v455, 2
    %v457 = vadd.f32 %v455, %v456
    %v458 = vrot.slane %v457, 1
    %v459 = vadd.f32 %v457, %v458
    %v460 = vld [vmem:[%s1] sm:$0xff]
    %v461 = vpack.c.bf16 %v460, %v460
    %v462 = vld [vmem:[%s8] sm:$0xf]
    %v463 = vld [vmem:[%s8 + $0x4] sm:$0xf]
    %v464 = vld [vmem:[%s8 + $0x8] sm:$0xf]
    %v465 = vld [vmem:[%s8 + $0xc] sm:$0xf]
    %v466 = vld [vmem:[%s7] sm:$0xf]
    %v467 = vld [vmem:[%s7 + $0x4] sm:$0xf]
    %v468 = vld [vmem:[%s7 + $0x8] sm:$0xf]
    %v469 = vld [vmem:[%s7 + $0xc] sm:$0xf]
    %v470 = vld [vmem:[%s7 + $0x10] sm:$0xf]
    %v471 = vld [vmem:[%s7 + $0x14] sm:$0xf]
    %v478 = vunpack.c.l.b16 %v466
    %v479 = vunpack.c.l.b16 %v467
    %v480 = vunpack.c.l.b16 %v468
    %v481 = vunpack.c.l.b16 %v469
    %v482 = vunpack.c.l.b16 %v470
    %v483 = vunpack.c.l.b16 %v471
    %v484 = vpack.c.b16 %v479, %v478
    %v485 = vpack.c.b16 %v481, %v480
    %v486 = vpack.c.b16 %v483, %v482
    %490 = vmatprep.subr.bf16.mxu0 0
    %491 = vmatpush1.bf16.msra.mxu0 %v484
    %492 = vmatprep.subr.bf16.mxu0 0
    %493 = vmatpush1.bf16.msra.mxu0 %v485
    %494 = vmatprep.subr.bf16.mxu0 0
    %495 = vmatpush1.bf16.msra.mxu0 %v486
    %496 = vmatprep.subr.bf16.mxu0 0
    %497 = vmatpush1.bf16.msra.mxu0 0
    %498 = vmatprep.subr.bf16.mxu0 0
    %499 = vmatpush1.bf16.msra.mxu0 0
    %500 = vmatprep.subr.bf16.mxu0 0
    %501 = vmatpush1.bf16.msra.mxu0 0
    %502 = vmatprep.subr.bf16.mxu0 0
    %503 = vmatpush1.bf16.msra.mxu0 0
    %504 = vmatprep.subr.bf16.mxu0 0
    %505 = vmatpush1.bf16.msra.mxu0 0
    %506 = vmatprep.subr.bf16.mxu0 0
    %507 = vmatpush1.bf16.msra.mxu0 0
    %508 = vmatprep.subr.bf16.mxu0 0
    %509 = vmatpush1.bf16.msra.mxu0 0
    %510 = vmatprep.subr.bf16.mxu0 0
    %511 = vmatpush1.bf16.msra.mxu0 0
    %512 = vmatprep.subr.bf16.mxu0 0
    %513 = vmatpush1.bf16.msra.mxu0 0
    %514 = vmatprep.subr.bf16.mxu0 0
    %515 = vmatpush1.bf16.msra.mxu0 0
    %516 = vmatprep.subr.bf16.mxu0 0
    %517 = vmatpush1.bf16.msra.mxu0 0
    %518 = vmatprep.subr.bf16.mxu0 0
    %519 = vmatpush1.bf16.msra.mxu0 0
    %520 = vmatprep.subr.bf16.mxu0 0
    %521 = vmatpush1.bf16.msra.mxu0 0
    %522 = vmatprep.mubr.bf16.mxu0 0
    %523 = vmatmul.mubr.bf16.gmra.mrb[0].mxu0 %v91
    %v524 = vpop.f32.mrb[0].mxu0
    %v525 = vadd.f32 0.0, %v524
    %v526 = vpop.f32.mrb[0].mxu0
    %v527 = vpop.f32.mrb[0].mxu0
    %v528 = vpop.f32.mrb[0].mxu0
    %529 = vdwg.mxu0
    %v534 = vunpack.c.l.b16 %v462
    %v535 = vunpack.c.l.b16 %v463
    %v536 = vunpack.c.l.b16 %v464
    %v537 = vunpack.c.l.b16 %v465
    %v538 = vpack.c.b16 %v535, %v534
    %v539 = vpack.c.b16 %v537, %v536
    %vm542 = vcmask 261120
    %v544 = vsel %vm542, %v461, 0
    %546 = vmatprep.subr.bf16.mxu0 0
    %547 = vmatpush1.bf16.msra.mxu0 %v538
    %548 = vmatprep.subr.bf16.mxu0 0
    %549 = vmatpush1.bf16.msra.mxu0 %v539
    %550 = vmatprep.subr.bf16.mxu0 0
    %551 = vmatpush1.bf16.msra.mxu0 0
    %552 = vmatprep.subr.bf16.mxu0 0
    %553 = vmatpush1.bf16.msra.mxu0 0
    %554 = vmatprep.subr.bf16.mxu0 0
    %555 = vmatpush1.bf16.msra.mxu0 0
    %556 = vmatprep.subr.bf16.mxu0 0
    %557 = vmatpush1.bf16.msra.mxu0 0
    %558 = vmatprep.subr.bf16.mxu0 0
    %559 = vmatpush1.bf16.msra.mxu0 0
    %560 = vmatprep.subr.bf16.mxu0 0
    %561 = vmatpush1.bf16.msra.mxu0 0
    %562 = vmatprep.subr.bf16.mxu0 0
    %563 = vmatpush1.bf16.msra.mxu0 0
    %564 = vmatprep.subr.bf16.mxu0 0
    %565 = vmatpush1.bf16.msra.mxu0 0
    %566 = vmatprep.subr.bf16.mxu0 0
    %567 = vmatpush1.bf16.msra.mxu0 0
    %568 = vmatprep.subr.bf16.mxu0 0
    %569 = vmatpush1.bf16.msra.mxu0 0
    %570 = vmatprep.subr.bf16.mxu0 0
    %571 = vmatpush1.bf16.msra.mxu0 0
    %572 = vmatprep.subr.bf16.mxu0 0
    %573 = vmatpush1.bf16.msra.mxu0 0
    %574 = vmatprep.subr.bf16.mxu0 0
    %575 = vmatpush1.bf16.msra.mxu0 0
    %576 = vmatprep.subr.bf16.mxu0 0
    %577 = vmatpush1.bf16.msra.mxu0 0
    %578 = vmatprep.mubr.bf16.mxu0 0
    %579 = vmatmul.mubr.bf16.gmra.mrb[0].mxu0 %v544
    %v580 = vpop.f32.mrb[0].mxu0
    %v581 = vadd.f32 %v525, %v580
    %v582 = vpop.f32.mrb[0].mxu0
    %v583 = vpop.f32.mrb[0].mxu0
    %v584 = vpop.f32.mrb[0].mxu0
    %585 = vdwg.mxu0
    %v586 = vld [vmem:[%s2] sm:$0xff]
    %v587 = vpack.c.bf16 %v586, %v586
    %v588 = vld [vmem:[%s9] sm:$0xf]
    %v589 = vld [vmem:[%s9 + $0x4] sm:$0xf]
    %v592 = vunpack.c.l.b16 %v588
    %v593 = vunpack.c.l.b16 %v589
    %v594 = vpack.c.b16 %v593, %v592
    %vm596 = vcmask 130048
    %v598 = vsel %vm596, %v587, 0
    %600 = vmatprep.subr.bf16.mxu0 0
    %601 = vmatpush1.bf16.msra.mxu0 %v594
    %602 = vmatprep.subr.bf16.mxu0 0
    %603 = vmatpush1.bf16.msra.mxu0 0
    %604 = vmatprep.subr.bf16.mxu0 0
    %605 = vmatpush1.bf16.msra.mxu0 0
    %606 = vmatprep.subr.bf16.mxu0 0
    %607 = vmatpush1.bf16.msra.mxu0 0
    %608 = vmatprep.subr.bf16.mxu0 0
    %609 = vmatpush1.bf16.msra.mxu0 0
    %610 = vmatprep.subr.bf16.mxu0 0
    %611 = vmatpush1.bf16.msra.mxu0 0
    %612 = vmatprep.subr.bf16.mxu0 0
    %613 = vmatpush1.bf16.msra.mxu0 0
    %614 = vmatprep.subr.bf16.mxu0 0
    %615 = vmatpush1.bf16.msra.mxu0 0
    %616 = vmatprep.subr.bf16.mxu0 0
    %617 = vmatpush1.bf16.msra.mxu0 0
    %618 = vmatprep.subr.bf16.mxu0 0
    %619 = vmatpush1.bf16.msra.mxu0 0
    %620 = vmatprep.subr.bf16.mxu0 0
    %621 = vmatpush1.bf16.msra.mxu0 0
    %622 = vmatprep.subr.bf16.mxu0 0
    %623 = vmatpush1.bf16.msra.mxu0 0
    %624 = vmatprep.subr.bf16.mxu0 0
    %625 = vmatpush1.bf16.msra.mxu0 0
    %626 = vmatprep.subr.bf16.mxu0 0
    %627 = vmatpush1.bf16.msra.mxu0 0
    %628 = vmatprep.subr.bf16.mxu0 0
    %629 = vmatpush1.bf16.msra.mxu0 0
    %630 = vmatprep.subr.bf16.mxu0 0
    %631 = vmatpush1.bf16.msra.mxu0 0
    %632 = vmatprep.mubr.bf16.mxu0 0
    %633 = vmatmul.mubr.bf16.gmra.mrb[0].mxu0 %v598
    %v634 = vpop.f32.mrb[0].mxu0
    %v635 = vadd.f32 0.0, %v634
    %v636 = vpop.f32.mrb[0].mxu0
    %v637 = vpop.f32.mrb[0].mxu0
    %v638 = vpop.f32.mrb[0].mxu0
    %639 = vdwg.mxu0
    %v640 = vadd.f32 %v581, %v635
    %v641 = vpack.c.bf16 %v410, %v410
    %v642 = vpack.c.bf16 %v417, %v417
    %v643 = vpack.c.bf16 %v424, %v424
    %v644 = vpack.c.bf16 %v431, %v431
    %v645 = vpack.c.bf16 %v438, %v438
    %v646 = vpack.c.bf16 %v445, %v445
    %v647 = vpack.c.bf16 %v452, %v452
    %v648 = vpack.c.bf16 %v459, %v459
    %v649 = vld [vmem:[%s10] sm:$0xf]
    %v650 = vld [vmem:[%s10 + $0x4] sm:$0xf]
    %v651 = vld [vmem:[%s10 + $0x8] sm:$0xf]
    %v652 = vld [vmem:[%s10 + $0xc] sm:$0xf]
    %v653 = vld [vmem:[%s10 + $0x10] sm:$0xf]
    %v654 = vld [vmem:[%s10 + $0x14] sm:$0xf]
    %v663 = vunpack.c.l.b16 %v641
    %v664 = vunpack.c.l.b16 %v642
    %v665 = vunpack.c.l.b16 %v643
    %v666 = vunpack.c.l.b16 %v644
    %v667 = vunpack.c.l.b16 %v645
    %v668 = vunpack.c.l.b16 %v646
    %v669 = vunpack.c.l.b16 %v647
    %v670 = vunpack.c.l.b16 %v648
    %v671 = vsel %vm310, %v664, %v663
    %v672 = vsel %vm312, %v665, %v671
    %v673 = vsel %vm314, %v666, %v672
    %v674 = vsel %vm316, %v667, %v673
    %v675 = vsel %vm318, %v668, %v674
    %v676 = vsel %vm320, %v669, %v675
    %v677 = vsel %vm322, %v670, %v676
    %v678 = vpack.c.b16 %v677, %v677
    %v685 = vunpack.c.l.b16 %v649
    %v686 = vunpack.c.l.b16 %v650
    %v687 = vunpack.c.l.b16 %v651
    %v688 = vunpack.c.l.b16 %v652
    %v689 = vunpack.c.l.b16 %v653
    %v690 = vunpack.c.l.b16 %v654
    %v691 = vpack.c.b16 %v686, %v685
    %v692 = vpack.c.b16 %v688, %v687
    %v693 = vpack.c.b16 %v690, %v689
    %v698 = vsel %vm89, %v678, 0
    %700 = vmatprep.subr.bf16.mxu0 0
    %701 = vmatpush1.bf16.msra.mxu0 %v691
    %702 = vmatprep.subr.bf16.mxu0 0
    %703 = vmatpush1.bf16.msra.mxu0 %v692
    %704 = vmatprep.subr.bf16.mxu0 0
    %705 = vmatpush1.bf16.msra.mxu0 %v693
    %706 = vmatprep.subr.bf16.mxu0 0
    %707 = vmatpush1.bf16.msra.mxu0 0
    %708 = vmatprep.subr.bf16.mxu0 0
    %709 = vmatpush1.bf16.msra.mxu0 0
    %710 = vmatprep.subr.bf16.mxu0 0
    %711 = vmatpush1.bf16.msra.mxu0 0
    %712 = vmatprep.subr.bf16.mxu0 0
    %713 = vmatpush1.bf16.msra.mxu0 0
    %714 = vmatprep.subr.bf16.mxu0 0
    %715 = vmatpush1.bf16.msra.mxu0 0
    %716 = vmatprep.subr.bf16.mxu0 0
    %717 = vmatpush1.bf16.msra.mxu0 0
    %718 = vmatprep.subr.bf16.mxu0 0
    %719 = vmatpush1.bf16.msra.mxu0 0
    %720 = vmatprep.subr.bf16.mxu0 0
    %721 = vmatpush1.bf16.msra.mxu0 0
    %722 = vmatprep.subr.bf16.mxu0 0
    %723 = vmatpush1.bf16.msra.mxu0 0
    %724 = vmatprep.subr.bf16.mxu0 0
    %725 = vmatpush1.bf16.msra.mxu0 0
    %726 = vmatprep.subr.bf16.mxu0 0
    %727 = vmatpush1.bf16.msra.mxu0 0
    %728 = vmatprep.subr.bf16.mxu0 0
    %729 = vmatpush1.bf16.msra.mxu0 0
    %730 = vmatprep.subr.bf16.mxu0 0
    %731 = vmatpush1.bf16.msra.mxu0 0
    %732 = vmatprep.mubr.bf16.mxu0 0
    %733 = vmatmul.mubr.bf16.gmra.mrb[0].mxu0 %v698
    %v734 = vpop.f32.mrb[0].mxu0
    %v735 = vadd.f32 0.0, %v734
    %v736 = vpop.f32.mrb[0].mxu0
    %v737 = vpop.f32.mrb[0].mxu0
    %v738 = vpop.f32.mrb[0].mxu0
    %739 = vdwg.mxu0
    %v740 = vadd.f32 %v640, %v735
    %v741 = vld [vmem:[%s11] sm:$0x1]
    %v743 = vlaneseq
    %v744 = vshrl.u32 %v743, 7
    %v745 = vsub.s32 0, %v744
    %v746 = vrot.slane %v741, %v745
    %v748 = vadd.f32 %v740, %v746
    %v749 = vmax.f32 %v748, 0.0
    %v750 = vpack.c.bf16 %v749, %v749
    %v751 = vld [vmem:[%s12] sm:$0xf]
    %v752 = vld [vmem:[%s12 + $0x4] sm:$0xf]
    %v753 = vld [vmem:[%s12 + $0x8] sm:$0xf]
    %v754 = vld [vmem:[%s12 + $0xc] sm:$0xf]
    %v755 = vld [vmem:[%s12 + $0x10] sm:$0xf]
    %v756 = vld [vmem:[%s12 + $0x14] sm:$0xf]
    %v757 = vld [vmem:[%s12 + $0x18] sm:$0xf]
    %v758 = vld [vmem:[%s12 + $0x1c] sm:$0xf]
    %v759 = vld [vmem:[%s13] sm:$0x1]
    %v761 = vlaneseq
    %v762 = vshrl.u32 %v761, 7
    %v763 = vsub.s32 0, %v762
    %v764 = vrot.slane %v759, %v763
    %v774 = vunpack.c.l.b16 %v751
    %v775 = vunpack.c.l.b16 %v752
    %v776 = vunpack.c.l.b16 %v753
    %v777 = vunpack.c.l.b16 %v754
    %v778 = vunpack.c.l.b16 %v755
    %v779 = vunpack.c.l.b16 %v756
    %v780 = vunpack.c.l.b16 %v757
    %v781 = vunpack.c.l.b16 %v758
    %v782 = vpack.c.b16 %v775, %v774
    %v783 = vpack.c.b16 %v777, %v776
    %v784 = vpack.c.b16 %v779, %v778
    %v785 = vpack.c.b16 %v781, %v780
    %vm790 = vcmask 523264
    %v792 = vsel %vm790, %v750, 0
    %794 = vmatprep.subr.bf16.mxu0 0
    %795 = vmatpush1.bf16.msra.mxu0 %v782
    %796 = vmatprep.subr.bf16.mxu0 0
    %797 = vmatpush1.bf16.msra.mxu0 %v783
    %798 = vmatprep.subr.bf16.mxu0 0
    %799 = vmatpush1.bf16.msra.mxu0 %v784
    %800 = vmatprep.subr.bf16.mxu0 0
    %801 = vmatpush1.bf16.msra.mxu0 %v785
    %802 = vmatprep.subr.bf16.mxu0 0
    %803 = vmatpush1.bf16.msra.mxu0 0
    %804 = vmatprep.subr.bf16.mxu0 0
    %805 = vmatpush1.bf16.msra.mxu0 0
    %806 = vmatprep.subr.bf16.mxu0 0
    %807 = vmatpush1.bf16.msra.mxu0 0
    %808 = vmatprep.subr.bf16.mxu0 0
    %809 = vmatpush1.bf16.msra.mxu0 0
    %810 = vmatprep.subr.bf16.mxu0 0
    %811 = vmatpush1.bf16.msra.mxu0 0
    %812 = vmatprep.subr.bf16.mxu0 0
    %813 = vmatpush1.bf16.msra.mxu0 0
    %814 = vmatprep.subr.bf16.mxu0 0
    %815 = vmatpush1.bf16.msra.mxu0 0
    %816 = vmatprep.subr.bf16.mxu0 0
    %817 = vmatpush1.bf16.msra.mxu0 0
    %818 = vmatprep.subr.bf16.mxu0 0
    %819 = vmatpush1.bf16.msra.mxu0 0
    %820 = vmatprep.subr.bf16.mxu0 0
    %821 = vmatpush1.bf16.msra.mxu0 0
    %822 = vmatprep.subr.bf16.mxu0 0
    %823 = vmatpush1.bf16.msra.mxu0 0
    %824 = vmatprep.subr.bf16.mxu0 0
    %825 = vmatpush1.bf16.msra.mxu0 0
    %826 = vmatprep.mubr.bf16.mxu0 0
    %827 = vmatmul.mubr.bf16.gmra.mrb[0].mxu0 %v792
    %v828 = vpop.f32.mrb[0].mxu0
    %v829 = vadd.f32 %v764, %v828
    %v830 = vpop.f32.mrb[0].mxu0
    %v831 = vpop.f32.mrb[0].mxu0
    %v832 = vpop.f32.mrb[0].mxu0
    %833 = vdwg.mxu0
    %v834 = vmax.f32 %v829, 0.0
    %v835 = vld [vmem:[%s14] sm:$0x1]
    %v837 = vlaneseq
    %v838 = vshrl.u32 %v837, 7
    %v839 = vsub.s32 0, %v838
    %v840 = vrot.slane %v835, %v839
    %v842 = vmul.f32 %v834, %v840
    %v843 = vsel %vm542, %v842, 0.0
    %844 = vadd.xlane.f32.xlu0 %v843
    %v845 = vpop.xlane.xlu0 %844
    %s846 = sld [smem:[#allocation2]]
    %v847 = vstv %s846
    %v848 = vadd.f32 %v845, %v847
    %v849 = vxor.u32 %v848, 2147483648
    %v850 = vmul.f32 %v849, 1.442695
    %v851 = vpow.pop %v850
    %v852 = vadd.f32 %v851, 1.0
    %v853 = vrcp.pop %v852
    %v854 = vmul.f32 1.0, %v853
    %v856 = vlaneseq
    %v857 = vshrl.u32 %v856, 7
    %v858 = vsub.s32 %v264, %v857
    %v859 = vrot.slane %v854, %v858
    %vm861 = vcmask 57344
    %862 = vst.msk [vmem:[#allocation3] sm:$0x1] %vm861, %v859
    // Predicated region
    $region66: #{din_wo_emb_forward.1} parent=1 // pred_check
      _
    $region67: #{din_wo_emb_forward.1} parent=1 // pred_check_branch
      %864 = sbr.rel (0) target = $region69
    $region68: #{din_wo_emb_forward.1} parent=1 // pred_region
      %s866 = ssub.s32 16, 16
      %867 = vsyncadd [#allocation4], %s866
      %s869 = sshll.u32 [#allocation3], 4
      %s870 = int_to_ptr.vmem [resolvable:$true] %s869
      %872 = dma.vmem_to_hbm [thread:$0]  %s870, 16, %s16, [#allocation4]
    $region69: #{din_wo_emb_forward.1} parent=1 // pred_fallthru
      _
    // Predicated region
    $region70: #{din_wo_emb_forward.1} parent=1 // pred_check
      _
    $region71: #{din_wo_emb_forward.1} parent=1 // pred_check_branch
      %874 = sbr.rel (0) target = $region73
    $region72: #{din_wo_emb_forward.1} parent=1 // pred_region
      %875 = dma.done [#allocation4], 16
    $region73: #{din_wo_emb_forward.1} parent=1 // pred_fallthru
      _
    %876 = vsyncpa [#allocation4], 1

</llo_original>
